<compile_context>
chip_gen: v6e
topology: v6e:2x2x1
jax: 0.10.0
libtpu: 0.0.40
codegen_flags: <defaults>
</compile_context>

<pallas_src>
import functools

import jax
import jax.numpy as jnp
from jax.experimental import pallas as pl
from jax.experimental.pallas import tpu as pltpu


def _round_up(x, m):
    return ((x + m - 1) // m) * m


# ---------------------------------------------------------------------------
# Pallas kernel: recurrence over one chunk of TT timesteps per grid step.
# ---------------------------------------------------------------------------
def _rnn_chunk_kernel(xproj_ref, wh_hbm_ref, h_ref, wh_vmem, wh_sem,
                      *, tt, tail, unroll):
    """xproj_ref: (tt, B_blk, H_pad) bf16  precomputed x_t @ W_ih^T + biases
       wh_hbm_ref: (H_pad, H_pad) bf16 in HBM (memory_space=pl.ANY)
       h_ref:      (B_blk, H_pad) f32, resident output block (hidden state)
       wh_vmem:    (H_pad, H_pad) bf16 VMEM scratch (single-buffered weight)
       wh_sem:     DMA semaphore for the one-shot weight copy"""
    c = pl.program_id(1)   # time-chunk index (innermost, "arbitrary")

    @pl.when(c == 0)
    def _():
        # h_0 = zeros (torch.nn.RNN default) + stage W_hh^T once into VMEM.
        h_ref[...] = jnp.zeros_like(h_ref)
        cp = pltpu.make_async_copy(wh_hbm_ref, wh_vmem, wh_sem)
        cp.start()
        cp.wait()

    wh = wh_vmem[...]  # bf16 (H_pad, H_pad), loaded once per chunk

    def step(i, h):
        pre = xproj_ref[i].astype(jnp.float32) + jnp.dot(
            h.astype(jnp.bfloat16), wh, preferred_element_type=jnp.float32)
        return jnp.tanh(pre)

    if tail == tt:
        # T divisible by TT: every chunk runs a mask-free full loop.
        h_ref[...] = jax.lax.fori_loop(0, tt, step, h_ref[...], unroll=unroll)
    else:
        n_last = pl.num_programs(1) - 1

        @pl.when(c != n_last)
        def _():
            h_ref[...] = jax.lax.fori_loop(0, tt, step, h_ref[...],
                                           unroll=unroll)

        @pl.when(c == n_last)
        def _():
            # Static shorter trip count for the tail -> no per-step mask.
            h_ref[...] = jax.lax.fori_loop(0, tail, step, h_ref[...],
                                           unroll=max(1, min(unroll, tail)))


def rnn_final_hidden_pallas(xp, wh_t, *, unroll=8,
                            xp_vmem_budget_bytes=24 << 20):
    """xp:   (T, B_pad, H_pad) bf16 precomputed input projection (biases folded).
       wh_t: (H_pad, H_pad) bf16 = W_hh^T, zero-padded.
       Returns final hidden state (B_pad, H_pad) f32."""
    T, B_pad, H_pad = xp.shape
    assert B_pad % 8 == 0 and H_pad % 128 == 0

    # Megacore batch split (v7x): two independent batch blocks, each >= 8 rows.
    n_bblk = 2 if (B_pad % 16 == 0) else 1
    B_blk = B_pad // n_bblk

    # Time-chunk size from a VMEM budget for the double-buffered bf16 chunk.
    xp_elt = jnp.dtype(xp.dtype).itemsize
    per_step = 2 * B_blk * H_pad * xp_elt
    TT = int(max(1, min(T, xp_vmem_budget_bytes // per_step, 1024)))
    n_chunks = -(-T // TT)
    tail = T - (n_chunks - 1) * TT   # static trip count of the last chunk

    wh_bytes = H_pad * H_pad * jnp.dtype(wh_t.dtype).itemsize
    vmem_need = (2 * TT * B_blk * H_pad * xp_elt   # double-buffered xproj chunk
                 + wh_bytes                        # single-buffered weight scratch
                 + 2 * B_blk * H_pad * 4           # output block
                 + (4 << 20))                      # margin
    vmem_limit = int(min(max(vmem_need, 16 << 20), 64 << 20))

    kernel = functools.partial(_rnn_chunk_kernel, tt=TT, tail=tail,
                               unroll=unroll)

    grid_spec = pltpu.PrefetchScalarGridSpec(
        num_scalar_prefetch=0,
        grid=(n_bblk, n_chunks),
        in_specs=[
            # one (TT, B_blk, H_pad) time chunk per grid step (pipelined)
            pl.BlockSpec((TT, B_blk, H_pad), lambda b, c: (c, b, 0)),
            # W_hh^T stays in HBM; DMA'd once per batch block into scratch
            pl.BlockSpec(memory_space=pl.ANY),
        ],
        # hidden state carried in the resident output block along the c axis
        out_specs=pl.BlockSpec((B_blk, H_pad), lambda b, c: (b, 0)),
        scratch_shapes=[
            pltpu.VMEM((H_pad, H_pad), wh_t.dtype),
            pltpu.SemaphoreType.DMA(()),
        ],
    )

    h_pad = pl.pallas_call(
        kernel,
        out_shape=jax.ShapeDtypeStruct((B_pad, H_pad), jnp.float32),
        grid_spec=grid_spec,
        compiler_params=pltpu.CompilerParams(
            dimension_semantics=("parallel", "arbitrary"),
            vmem_limit_bytes=vmem_limit,
        ),
    )(xp, wh_t)
    return h_pad


# ---------------------------------------------------------------------------
# Shared preprocessing: time-major gather + hoisted projection, padded & bf16.
# ---------------------------------------------------------------------------
def _prepare_inputs(params, x):
    B, T = x.shape
    H = params["w_hh"].shape[0]
    B_pad = _round_up(B, 8)
    H_pad = _round_up(H, 128)

    # Pad token ids (padded rows gather a valid token; rows are independent
    # in the recurrence and are sliced off at the end).
    x_pad = jnp.pad(x, ((0, B_pad - B), (0, 0)))
    emb_tbe = jnp.take(params["embedding"].astype(jnp.float32),
                       jnp.transpose(x_pad), axis=0)          # (T, B_pad, E)

    # Pad the *small* weights so x_proj is produced already lane-padded
    # (no jnp.pad round trip of the big (T, B, H) activation).
    w_ih_p = jnp.pad(params["w_ih"].astype(jnp.float32),
                     ((0, H_pad - H), (0, 0)))                # (H_pad, E)
    bias_p = jnp.pad((params["b_ih"] + params["b_hh"]).astype(jnp.float32),
                     (0, H_pad - H))                          # (H_pad,)

    x_proj = jnp.einsum("tbe,he->tbh", emb_tbe, w_ih_p) + bias_p
    xp_bf16 = x_proj.astype(jnp.bfloat16)                     # bf16 streaming

    wh_t = jnp.pad(jnp.transpose(params["w_hh"]).astype(jnp.float32),
                   ((0, H_pad - H), (0, H_pad - H))).astype(jnp.bfloat16)
    return xp_bf16, wh_t, B, H, B_pad, H_pad


def encoder_forward(params, x):
    """x: (B, T) int32 token ids. Returns hidden (num_layers=1, B, H),
    matching PyTorch nn.RNN(batch_first=True) `hidden` output."""
    xp, wh_t, B, H, _, _ = _prepare_inputs(params, x)
    h_pad = rnn_final_hidden_pallas(xp, wh_t)                 # (B_pad, H_pad)
    return h_pad[:B, :H][None, :, :]                          # (1, B, H)


def encoder_forward_ref_matched(params, x):
    """Pure-JAX reference with the SAME numerics (bf16 x_proj / weights,
    f32 accumulation) for a tight correctness check."""
    xp, wh_t, B, H, B_pad, H_pad = _prepare_inputs(params, x)

    def step(h, xt):
        pre = xt.astype(jnp.float32) + jnp.dot(
            h.astype(jnp.bfloat16), wh_t, preferred_element_type=jnp.float32)
        return jnp.tanh(pre), None

    h0 = jnp.zeros((B_pad, H_pad), jnp.float32)
    h_final, _ = jax.lax.scan(step, h0, xp)
    return h_final[:B, :H][None, :, :]


def encoder_forward_ref_f32(params, x):
    """Independent full-f32 reference (loose sanity check)."""
    embedded = jnp.take(params["embedding"], x, axis=0)       # (B, T, E)
    B = x.shape[0]
    H = params["w_hh"].shape[0]

    def step(h, x_t):
        h_new = jnp.tanh(x_t @ params["w_ih"].T + params["b_ih"]
                         + h @ params["w_hh"].T + params["b_hh"])
        return h_new, None

    h0 = jnp.zeros((B, H), jnp.float32)
    h_final, _ = jax.lax.scan(step, h0, jnp.transpose(embedded, (1, 0, 2)))
    return h_final[None, :, :]


def init_params(key, vocab_size, embedding_size, hidden_size):
    k_emb, k_wih, k_whh, k_bih, k_bhh = jax.random.split(key, 5)
    bound = 1.0 / jnp.sqrt(hidden_size)   # PyTorch RNN default init range
    return {
        "embedding": jax.random.normal(k_emb, (vocab_size, embedding_size),
                                       jnp.float32),
        "w_ih": jax.random.uniform(k_wih, (hidden_size, embedding_size),
                                   jnp.float32, -bound, bound),
        "w_hh": jax.random.uniform(k_whh, (hidden_size, hidden_size),
                                   jnp.float32, -bound, bound),
        "b_ih": jax.random.uniform(k_bih, (hidden_size,), jnp.float32,
                                   -bound, bound),
        "b_hh": jax.random.uniform(k_bhh, (hidden_size,), jnp.float32,
                                   -bound, bound),
    }


if __name__ == "__main__":
    # config: cell_type='rnn', encoder_layers=1, dropout inactive (single layer)
    VOCAB, EMB, HID = 32, 16, 32
    B, T = 2, 8

    key = jax.random.PRNGKey(0)
    k_params, k_x = jax.random.split(key)
    params = init_params(k_params, VOCAB, EMB, HID)
    x = jax.random.randint(k_x, (B, T), 0, VOCAB, dtype=jnp.int32)

    fwd = jax.jit(encoder_forward)
    hidden = jax.block_until_ready(fwd(params, x))
    hidden_matched = jax.block_until_ready(
        jax.jit(encoder_forward_ref_matched)(params, x))
    hidden_f32 = jax.block_until_ready(
        jax.jit(encoder_forward_ref_f32)(params, x))

    assert hidden.shape == (1, B, HID), hidden.shape
    # Tight check vs precision-matched reference (same bf16 rounding points).
    assert jnp.allclose(hidden, hidden_matched, atol=1e-4, rtol=1e-4), (
        "mismatch vs precision-matched reference")
    # Loose sanity check vs independent full-f32 reference (bf16 drift bound).
    assert jnp.allclose(hidden, hidden_f32, atol=5e-2, rtol=5e-2), (
        "mismatch vs f32 reference beyond bf16 tolerance")

    print("KERNEL_OK")
</pallas_src>

<mosaic_0001>
module attributes {stable_mosaic.version = 11 : i64} {
  func.func @_rnn_chunk_kernel(%arg0: i32, %arg1: i32, %arg2: memref<8x8x128xbf16, #tpu.memory_space<vmem>>, %arg3: memref<128x128xbf16, #tpu.memory_space<any>>, %arg4: memref<8x128xf32, #tpu.memory_space<vmem>>, %arg5: memref<128x128xbf16, #tpu.memory_space<vmem>>, %arg6: memref<!tpu.dma_semaphore, #tpu.memory_space<semaphore_mem>>) attributes {dimension_semantics = [#tpu.dimension_semantics<parallel>, #tpu.dimension_semantics<arbitrary>], iteration_bounds = array<i64: 1, 1>, scalar_prefetch = 0 : i64, scratch_operands = 2 : i64, tpu.core_type = #tpu.core_type<tc>, window_params = [{transform_indices = @transform_0, window_bounds = array<i64: 8, 8, 128>}, {}, {transform_indices = @transform_2, window_bounds = array<i64: 8, 128>}]} {
    %c0_i32 = arith.constant 0 : i32
    %0 = arith.cmpi eq, %arg1, %c0_i32 : i32
    %1 = arith.extui %0 : i1 to i32
    %c0_i32_0 = arith.constant 0 : i32
    %2 = arith.cmpi ne, %1, %c0_i32_0 : i32
    scf.if %2 {
      %cst_30 = arith.constant 0.000000e+00 : f32
      %70 = vector.broadcast %cst_30 : f32 to vector<8x128xf32>
      %c0_31 = arith.constant 0 : index
      %c0_32 = arith.constant 0 : index
      %71 = vector.load %arg4[%c0_31, %c0_32] : memref<8x128xf32, #tpu.memory_space<vmem>>, vector<8x128xf32>
      tpu.vector_store %arg4[%c0_31, %c0_32], %70 {strides = array<i32>} : memref<8x128xf32, #tpu.memory_space<vmem>>, vector<8x128xf32>,
      tpu.enqueue_dma source(%arg3 : memref<128x128xbf16, #tpu.memory_space<any>>) target(%arg5 : memref<128x128xbf16, #tpu.memory_space<vmem>>) target_semaphore(%arg6 : memref<!tpu.dma_semaphore, #tpu.memory_space<semaphore_mem>>)
      tpu.wait_dma2 semaphore(%arg6 : memref<!tpu.dma_semaphore, #tpu.memory_space<semaphore_mem>>) src(%arg3 : memref<128x128xbf16, #tpu.memory_space<any>>) dst(%arg5 : memref<128x128xbf16, #tpu.memory_space<vmem>>)
    } else {
    }
    %c0 = arith.constant 0 : index
    %c0_1 = arith.constant 0 : index
    %3 = vector.load %arg5[%c0, %c0_1] : memref<128x128xbf16, #tpu.memory_space<vmem>>, vector<128x128xbf16>
    %c0_2 = arith.constant 0 : index
    %c0_3 = arith.constant 0 : index
    %4 = vector.load %arg4[%c0_2, %c0_3] : memref<8x128xf32, #tpu.memory_space<vmem>>, vector<8x128xf32>
    %c0_i32_4 = arith.constant 0 : i32
    %5 = arith.index_cast %c0_i32_4 : i32 to index
    %c0_5 = arith.constant 0 : index
    %c0_6 = arith.constant 0 : index
    %6 = vector.load %arg2[%5, %c0_5, %c0_6] : memref<8x8x128xbf16, #tpu.memory_space<vmem>>, vector<1x8x128xbf16>
    %7 = vector.shape_cast %6 : vector<1x8x128xbf16> to vector<8x128xbf16>
    %8 = arith.extf %7 : vector<8x128xbf16> to vector<8x128xf32>
    %9 = arith.truncf %4 : vector<8x128xf32> to vector<8x128xbf16>
    %cst = arith.constant dense<0.000000e+00> : vector<8x128xf32>
    %10 = tpu.matmul %9, %3, %cst {dimension_numbers = #tpu.dot_dimension_numbers<[1], [0], [0], [1], [0, 0, 1, 1], [], []>} : vector<8x128xbf16>, vector<128x128xbf16>, vector<8x128xf32> -> vector<8x128xf32>
    %11 = arith.addf %8, %10 : vector<8x128xf32>
    %12 = math.tanh %11 : vector<8x128xf32>
    %c1_i32 = arith.constant 1 : i32
    %13 = arith.index_cast %c1_i32 : i32 to index
    %c0_7 = arith.constant 0 : index
    %c0_8 = arith.constant 0 : index
    %14 = vector.load %arg2[%13, %c0_7, %c0_8] : memref<8x8x128xbf16, #tpu.memory_space<vmem>>, vector<1x8x128xbf16>
    %15 = vector.shape_cast %14 : vector<1x8x128xbf16> to vector<8x128xbf16>
    %16 = arith.extf %15 : vector<8x128xbf16> to vector<8x128xf32>
    %17 = arith.truncf %12 : vector<8x128xf32> to vector<8x128xbf16>
    %cst_9 = arith.constant dense<0.000000e+00> : vector<8x128xf32>
    %18 = tpu.matmul %17, %3, %cst_9 {dimension_numbers = #tpu.dot_dimension_numbers<[1], [0], [0], [1], [0, 0, 1, 1], [], []>} : vector<8x128xbf16>, vector<128x128xbf16>, vector<8x128xf32> -> vector<8x128xf32>
    %19 = arith.addf %16, %18 : vector<8x128xf32>
    %20 = math.tanh %19 : vector<8x128xf32>
    %c2_i32 = arith.constant 2 : i32
    %21 = arith.index_cast %c2_i32 : i32 to index
    %c0_10 = arith.constant 0 : index
    %c0_11 = arith.constant 0 : index
    %22 = vector.load %arg2[%21, %c0_10, %c0_11] : memref<8x8x128xbf16, #tpu.memory_space<vmem>>, vector<1x8x128xbf16>
    %23 = vector.shape_cast %22 : vector<1x8x128xbf16> to vector<8x128xbf16>
    %24 = arith.extf %23 : vector<8x128xbf16> to vector<8x128xf32>
    %25 = arith.truncf %20 : vector<8x128xf32> to vector<8x128xbf16>
    %cst_12 = arith.constant dense<0.000000e+00> : vector<8x128xf32>
    %26 = tpu.matmul %25, %3, %cst_12 {dimension_numbers = #tpu.dot_dimension_numbers<[1], [0], [0], [1], [0, 0, 1, 1], [], []>} : vector<8x128xbf16>, vector<128x128xbf16>, vector<8x128xf32> -> vector<8x128xf32>
    %27 = arith.addf %24, %26 : vector<8x128xf32>
    %28 = math.tanh %27 : vector<8x128xf32>
    %c3_i32 = arith.constant 3 : i32
    %29 = arith.index_cast %c3_i32 : i32 to index
    %c0_13 = arith.constant 0 : index
    %c0_14 = arith.constant 0 : index
    %30 = vector.load %arg2[%29, %c0_13, %c0_14] : memref<8x8x128xbf16, #tpu.memory_space<vmem>>, vector<1x8x128xbf16>
    %31 = vector.shape_cast %30 : vector<1x8x128xbf16> to vector<8x128xbf16>
    %32 = arith.extf %31 : vector<8x128xbf16> to vector<8x128xf32>
    %33 = arith.truncf %28 : vector<8x128xf32> to vector<8x128xbf16>
    %cst_15 = arith.constant dense<0.000000e+00> : vector<8x128xf32>
    %34 = tpu.matmul %33, %3, %cst_15 {dimension_numbers = #tpu.dot_dimension_numbers<[1], [0], [0], [1], [0, 0, 1, 1], [], []>} : vector<8x128xbf16>, vector<128x128xbf16>, vector<8x128xf32> -> vector<8x128xf32>
    %35 = arith.addf %32, %34 : vector<8x128xf32>
    %36 = math.tanh %35 : vector<8x128xf32>
    %c4_i32 = arith.constant 4 : i32
    %37 = arith.index_cast %c4_i32 : i32 to index
    %c0_16 = arith.constant 0 : index
    %c0_17 = arith.constant 0 : index
    %38 = vector.load %arg2[%37, %c0_16, %c0_17] : memref<8x8x128xbf16, #tpu.memory_space<vmem>>, vector<1x8x128xbf16>
    %39 = vector.shape_cast %38 : vector<1x8x128xbf16> to vector<8x128xbf16>
    %40 = arith.extf %39 : vector<8x128xbf16> to vector<8x128xf32>
    %41 = arith.truncf %36 : vector<8x128xf32> to vector<8x128xbf16>
    %cst_18 = arith.constant dense<0.000000e+00> : vector<8x128xf32>
    %42 = tpu.matmul %41, %3, %cst_18 {dimension_numbers = #tpu.dot_dimension_numbers<[1], [0], [0], [1], [0, 0, 1, 1], [], []>} : vector<8x128xbf16>, vector<128x128xbf16>, vector<8x128xf32> -> vector<8x128xf32>
    %43 = arith.addf %40, %42 : vector<8x128xf32>
    %44 = math.tanh %43 : vector<8x128xf32>
    %c5_i32 = arith.constant 5 : i32
    %45 = arith.index_cast %c5_i32 : i32 to index
    %c0_19 = arith.constant 0 : index
    %c0_20 = arith.constant 0 : index
    %46 = vector.load %arg2[%45, %c0_19, %c0_20] : memref<8x8x128xbf16, #tpu.memory_space<vmem>>, vector<1x8x128xbf16>
    %47 = vector.shape_cast %46 : vector<1x8x128xbf16> to vector<8x128xbf16>
    %48 = arith.extf %47 : vector<8x128xbf16> to vector<8x128xf32>
    %49 = arith.truncf %44 : vector<8x128xf32> to vector<8x128xbf16>
    %cst_21 = arith.constant dense<0.000000e+00> : vector<8x128xf32>
    %50 = tpu.matmul %49, %3, %cst_21 {dimension_numbers = #tpu.dot_dimension_numbers<[1], [0], [0], [1], [0, 0, 1, 1], [], []>} : vector<8x128xbf16>, vector<128x128xbf16>, vector<8x128xf32> -> vector<8x128xf32>
    %51 = arith.addf %48, %50 : vector<8x128xf32>
    %52 = math.tanh %51 : vector<8x128xf32>
    %c6_i32 = arith.constant 6 : i32
    %53 = arith.index_cast %c6_i32 : i32 to index
    %c0_22 = arith.constant 0 : index
    %c0_23 = arith.constant 0 : index
    %54 = vector.load %arg2[%53, %c0_22, %c0_23] : memref<8x8x128xbf16, #tpu.memory_space<vmem>>, vector<1x8x128xbf16>
    %55 = vector.shape_cast %54 : vector<1x8x128xbf16> to vector<8x128xbf16>
    %56 = arith.extf %55 : vector<8x128xbf16> to vector<8x128xf32>
    %57 = arith.truncf %52 : vector<8x128xf32> to vector<8x128xbf16>
    %cst_24 = arith.constant dense<0.000000e+00> : vector<8x128xf32>
    %58 = tpu.matmul %57, %3, %cst_24 {dimension_numbers = #tpu.dot_dimension_numbers<[1], [0], [0], [1], [0, 0, 1, 1], [], []>} : vector<8x128xbf16>, vector<128x128xbf16>, vector<8x128xf32> -> vector<8x128xf32>
    %59 = arith.addf %56, %58 : vector<8x128xf32>
    %60 = math.tanh %59 : vector<8x128xf32>
    %c7_i32 = arith.constant 7 : i32
    %61 = arith.index_cast %c7_i32 : i32 to index
    %c0_25 = arith.constant 0 : index
    %c0_26 = arith.constant 0 : index
    %62 = vector.load %arg2[%61, %c0_25, %c0_26] : memref<8x8x128xbf16, #tpu.memory_space<vmem>>, vector<1x8x128xbf16>
    %63 = vector.shape_cast %62 : vector<1x8x128xbf16> to vector<8x128xbf16>
    %64 = arith.extf %63 : vector<8x128xbf16> to vector<8x128xf32>
    %65 = arith.truncf %60 : vector<8x128xf32> to vector<8x128xbf16>
    %cst_27 = arith.constant dense<0.000000e+00> : vector<8x128xf32>
    %66 = tpu.matmul %65, %3, %cst_27 {dimension_numbers = #tpu.dot_dimension_numbers<[1], [0], [0], [1], [0, 0, 1, 1], [], []>} : vector<8x128xbf16>, vector<128x128xbf16>, vector<8x128xf32> -> vector<8x128xf32>
    %67 = arith.addf %64, %66 : vector<8x128xf32>
    %68 = math.tanh %67 : vector<8x128xf32>
    %c8_i32 = arith.constant 8 : i32
    %c0_28 = arith.constant 0 : index
    %c0_29 = arith.constant 0 : index
    %69 = vector.load %arg4[%c0_28, %c0_29] : memref<8x128xf32, #tpu.memory_space<vmem>>, vector<8x128xf32>
    tpu.vector_store %arg4[%c0_28, %c0_29], %68 {strides = array<i32>} : memref<8x128xf32, #tpu.memory_space<vmem>>, vector<8x128xf32>,
    return
  }
  func.func @transform_0(%arg0: i32, %arg1: i32) -> (i32, i32, i32) {
    %c0_i32 = arith.constant 0 : i32
    %c0_i32_0 = arith.constant 0 : i32
    return %arg1, %arg0, %c0_i32 : i32, i32, i32
  }
  func.func @transform_2(%arg0: i32, %arg1: i32) -> (i32, i32) {
    %c0_i32 = arith.constant 0 : i32
    %c0_i32_0 = arith.constant 0 : i32
    return %arg0, %c0_i32 : i32, i32
  }
}

</mosaic_0001>

<llo_original>
// kernel: encoder_forward.1
$region0: #{encoder_forward.1}
  #allocation0 [shape = 'u32[]', space=smem, size = 0x4, offset = 0x4, fixed_abs, tag = 'smem constant byte address 0x4 - core index']
  #allocation1 [shape = 'u32[144,128]{1,0:T(1,128)}', space=vmem, size = 0x12000, scoped, tag = 'internal scratch']
  #allocation2 [shape = 'bf16[128,128]{1,0:T(8,128)(2,1)}', space=vmem, size = 0x8000, scoped, tag = 'scratch operand']
  #allocation3 [shape = 's32[1]{0}', space=sflag, size = 0x4, scoped, tag = 'scratch operand']
  #allocation4 [shape = 's32[]', space=sflag, size = 0x4, offset = 0, fixed_abs, tag = 'sflag constant byte address 0x0 - dummy sync flag']
  %s0 = inlined_call_operand.vmem [shape: bf16[8,8,128], index: 0, kind: input, shape index: {}]
  %s1 = inlined_call_operand.vmem [shape: bf16[128,128], index: 1, kind: input, shape index: {}]
  %s2 = inlined_call_operand.vmem [shape: f32[8,128], index: 2, kind: output, shape index: {}]
  %s3 = sld [smem:[#allocation0]]
  $region52: #{encoder_forward.1} parent=0
    _
  %s5 = ssub.s32 1, %s3
  %s6 = scalar_select 0, %s5, %s3
  // Predicated region
  $region2: #{encoder_forward.1} parent=0 // pred_check
    _
  $region3: #{encoder_forward.1} parent=0 // pred_check_branch
    %8 = sbr.rel (0) target = $region5
  $region4: #{encoder_forward.1} parent=0 // pred_region
    _
  $region5: #{encoder_forward.1} parent=0 // pred_fallthru
    _
  %p10 = scmp.eq.s32.totalorder 0, 0
  // Predicated region
  $region6: #{encoder_forward.1} parent=0 // pred_check
    %p11 = pneg %p10
  $region7: #{encoder_forward.1} parent=0 // pred_check_branch
    %13 = sbr.rel (%p11) target = $region9
  $region8: #{encoder_forward.1} parent=0 // pred_region
    %14 = vst [vmem:[%s2] sm:$0xff] 0.0
    %p16 = scmp.lt.u32.totalorder 64, 8
    %p17 = pneg %p16
    // Predicated region
    $region10: #{encoder_forward.1} parent=8 // pred_check
      _
    $region11: #{encoder_forward.1} parent=8 // pred_check_branch
      %19 = sbr.rel (%p16) target = $region13
    $region12: #{encoder_forward.1} parent=8 // pred_region
      %s35 = sand.u32 64, 7
      %p36 = scmp.eq.s32.totalorder %s35, 0
      // Predicated region
      $region25: #{encoder_forward.1} parent=12 // pred_check
        %p37 = pneg %p36
      $region26: #{encoder_forward.1} parent=12 // pred_check_branch
        %39 = sbr.rel (%p37) target = $region28
      $region27: #{encoder_forward.1} parent=12 // pred_region
        loop: start=0, step=1, limit=1
        $region29: #{encoder_forward.1} parent=27 // loop_pre_header
          _
        $region30: #{encoder_forward.1} parent=27 // loop_header
          %s41 = sphi 0, %s45
          %p42 = scmp.ge.s32.totalorder %s41, 1
          %s46 = sphi %s1, %s1
          %s47 = sphi [#allocation2], [#allocation2]
        $region31: #{encoder_forward.1} parent=27 // loop_header_branch
          %44 = sbr.rel (%p42) target = $region35
        $region32: #{encoder_forward.1} parent=27 // loop_body
          %v48 = vld [vmem:[%s46] sm:$0xff]
          %49 = vst [vmem:[%s47] sm:$0xff] %v48
          %v50 = vld [vmem:[%s46 + $0x8] sm:$0xff]
          %51 = vst [vmem:[%s47 + $0x8] sm:$0xff] %v50
          %v52 = vld [vmem:[%s46 + $0x10] sm:$0xff]
          %53 = vst [vmem:[%s47 + $0x10] sm:$0xff] %v52
          %v54 = vld [vmem:[%s46 + $0x18] sm:$0xff]
          %55 = vst [vmem:[%s47 + $0x18] sm:$0xff] %v54
          %v56 = vld [vmem:[%s46 + $0x20] sm:$0xff]
          %57 = vst [vmem:[%s47 + $0x20] sm:$0xff] %v56
          %v58 = vld [vmem:[%s46 + $0x28] sm:$0xff]
          %59 = vst [vmem:[%s47 + $0x28] sm:$0xff] %v58
          %v60 = vld [vmem:[%s46 + $0x30] sm:$0xff]
          %61 = vst [vmem:[%s47 + $0x30] sm:$0xff] %v60
          %v62 = vld [vmem:[%s46 + $0x38] sm:$0xff]
          %63 = vst [vmem:[%s47 + $0x38] sm:$0xff] %v62
        $region33: #{encoder_forward.1} parent=27 // loop_footer
          %s45 = sadd.s32 1, %s41
        $region34: #{encoder_forward.1} parent=27 // loop_footer_branch
          %40 = sbr.rel target = $region30
        $region35: #{encoder_forward.1} parent=27 // loop_exit
          _
      $region28: #{encoder_forward.1} parent=12 // pred_fallthru
        _
      %p64 = pneg %p36
      // Predicated region
      $region36: #{encoder_forward.1} parent=12 // pred_check
        _
      $region37: #{encoder_forward.1} parent=12 // pred_check_branch
        %66 = sbr.rel (%p36) target = $region39
      $region38: #{encoder_forward.1} parent=12 // pred_region
        %s67 = sand.u32 64, 7
      $region39: #{encoder_forward.1} parent=12 // pred_fallthru
        _
    $region13: #{encoder_forward.1} parent=8 // pred_fallthru
      _
    // Predicated region
    $region14: #{encoder_forward.1} parent=8 // pred_check
      %p20 = pneg %p16
    $region15: #{encoder_forward.1} parent=8 // pred_check_branch
      %22 = sbr.rel (%p20) target = $region17
    $region16: #{encoder_forward.1} parent=8 // pred_region
      %s23 = sshll.u32 1, 64
      %s24 = ssub.s32 %s23, 1
      loop: start=0, step=1, limit=1
      $region18: #{encoder_forward.1} parent=16 // loop_pre_header
        _
      $region19: #{encoder_forward.1} parent=16 // loop_header
        %s26 = sphi 0, %s30
        %p27 = scmp.ge.s32.totalorder %s26, 1
        %s31 = sphi %s1, %s1
        %s32 = sphi [#allocation2], [#allocation2]
      $region20: #{encoder_forward.1} parent=16 // loop_header_branch
        %29 = sbr.rel (%p27) target = $region24
      $region21: #{encoder_forward.1} parent=16 // loop_body
        %v33 = vld [vmem:[%s31] sm:%s24]
        %34 = vst [vmem:[%s32] sm:%s24] %v33
      $region22: #{encoder_forward.1} parent=16 // loop_footer
        %s30 = sadd.s32 1, %s26
      $region23: #{encoder_forward.1} parent=16 // loop_footer_branch
        %25 = sbr.rel target = $region19
      $region24: #{encoder_forward.1} parent=16 // loop_exit
        _
    $region17: #{encoder_forward.1} parent=8 // pred_fallthru
      _
    // Predicated region
    $region40: #{encoder_forward.1} parent=8 // pred_check
      _
    $region41: #{encoder_forward.1} parent=8 // pred_check_branch
      %70 = sbr.rel (0) target = $region43
    $region42: #{encoder_forward.1} parent=8 // pred_region
      %71 = vsyncadd [#allocation3], 1024
    $region43: #{encoder_forward.1} parent=8 // pred_fallthru
      _
    %s72 = smul.u32 4, 16
    %s73 = smul.u32 %s72, 1
    %s74 = sshll.u32 %s73, 4
    %75 = dma.done [#allocation3], %s74
  $region9: #{encoder_forward.1} parent=0 // pred_fallthru
    _
  %v76 = vld [vmem:[#allocation2] sm:$0xf]
  %v77 = vld [vmem:[#allocation2 + $0x4] sm:$0xf]
  %v78 = vld [vmem:[#allocation2 + $0x8] sm:$0xf]
  %v79 = vld [vmem:[#allocation2 + $0xc] sm:$0xf]
  %v80 = vld [vmem:[#allocation2 + $0x10] sm:$0xf]
  %v81 = vld [vmem:[#allocation2 + $0x14] sm:$0xf]
  %v82 = vld [vmem:[#allocation2 + $0x18] sm:$0xf]
  %v83 = vld [vmem:[#allocation2 + $0x1c] sm:$0xf]
  %v84 = vld [vmem:[#allocation2 + $0x20] sm:$0xf]
  %v85 = vld [vmem:[#allocation2 + $0x24] sm:$0xf]
  %v86 = vld [vmem:[#allocation2 + $0x28] sm:$0xf]
  %v87 = vld [vmem:[#allocation2 + $0x2c] sm:$0xf]
  %v88 = vld [vmem:[#allocation2 + $0x30] sm:$0xf]
  %v89 = vld [vmem:[#allocation2 + $0x34] sm:$0xf]
  %v90 = vld [vmem:[#allocation2 + $0x38] sm:$0xf]
  %v91 = vld [vmem:[#allocation2 + $0x3c] sm:$0xf]
  %v92 = vld [vmem:[%s2] sm:$0xff]
  %v93 = vld [vmem:[%s0] sm:$0xf]
  %v94 = vunpack.c.l.bf16 %v93
  %v95 = vpack.c.bf16 %v92, %v92
  %v112 = vunpack.c.l.b16 %v76
  %v113 = vunpack.c.l.b16 %v77
  %v114 = vunpack.c.l.b16 %v78
  %v115 = vunpack.c.l.b16 %v79
  %v116 = vunpack.c.l.b16 %v80
  %v117 = vunpack.c.l.b16 %v81
  %v118 = vunpack.c.l.b16 %v82
  %v119 = vunpack.c.l.b16 %v83
  %v120 = vunpack.c.l.b16 %v84
  %v121 = vunpack.c.l.b16 %v85
  %v122 = vunpack.c.l.b16 %v86
  %v123 = vunpack.c.l.b16 %v87
  %v124 = vunpack.c.l.b16 %v88
  %v125 = vunpack.c.l.b16 %v89
  %v126 = vunpack.c.l.b16 %v90
  %v127 = vunpack.c.l.b16 %v91
  %v128 = vpack.c.b16 %v113, %v112
  %v129 = vpack.c.b16 %v115, %v114
  %v130 = vpack.c.b16 %v117, %v116
  %v131 = vpack.c.b16 %v119, %v118
  %v132 = vpack.c.b16 %v121, %v120
  %v133 = vpack.c.b16 %v123, %v122
  %v134 = vpack.c.b16 %v125, %v124
  %v135 = vpack.c.b16 %v127, %v126
  %144 = vmatprep.subr.bf16.mxu0 0
  %145 = vmatpush1.bf16.msra.mxu0 %v135
  %146 = vmatprep.subr.bf16.mxu0 0
  %147 = vmatpush1.bf16.msra.mxu0 %v134
  %148 = vmatprep.subr.bf16.mxu0 0
  %149 = vmatpush1.bf16.msra.mxu0 %v133
  %150 = vmatprep.subr.bf16.mxu0 0
  %151 = vmatpush1.bf16.msra.mxu0 %v132
  %152 = vmatprep.subr.bf16.mxu0 0
  %153 = vmatpush1.bf16.msra.mxu0 %v131
  %154 = vmatprep.subr.bf16.mxu0 0
  %155 = vmatpush1.bf16.msra.mxu0 %v130
  %156 = vmatprep.subr.bf16.mxu0 0
  %157 = vmatpush1.bf16.msra.mxu0 %v129
  %158 = vmatprep.subr.bf16.mxu0 0
  %159 = vmatpush1.bf16.msra.mxu0 %v128
  %160 = vmatprep.subr.bf16.mxu0 0
  %161 = vmatpush2.bf16.msra.mxu0 0
  %162 = vmatprep.subr.bf16.mxu0 0
  %163 = vmatpush2.bf16.msra.mxu0 0
  %164 = vmatprep.subr.bf16.mxu0 0
  %165 = vmatpush2.bf16.msra.mxu0 0
  %166 = vmatprep.subr.bf16.mxu0 0
  %167 = vmatpush2.bf16.msra.mxu0 0
  %168 = vmatprep.subr.bf16.mxu0 0
  %169 = vmatpush2.bf16.msra.mxu0 0
  %170 = vmatprep.subr.bf16.mxu0 0
  %171 = vmatpush2.bf16.msra.mxu0 0
  %172 = vmatprep.subr.bf16.mxu0 0
  %173 = vmatpush2.bf16.msra.mxu0 0
  %174 = vmatprep.subr.bf16.mxu0 0
  %175 = vmatpush2.bf16.msra.mxu0 0
  %176 = vmatprep.mubr.bf16.mxu0 0
  %177 = vmatmul.mubr.bf16.gmra.mxu0 %v95
  %v178 = vpop.f32.mrf.mxu0
  %v179 = vadd.f32 0.0, %v178
  %v180 = vpop.f32.mrf.mxu0
  %v181 = vpop.f32.mrf.mxu0
  %v182 = vpop.f32.mrf.mxu0
  %183 = vdwg.mxu0
  %v184 = vadd.f32 %v94, %v179
  %v185 = vtanh.pop %v184
  %s186 = scalar_lea.vmem %s0, 4
  %v187 = vld [vmem:[%s186] sm:$0xf]
  %v188 = vunpack.c.l.bf16 %v187
  %v189 = vpack.c.bf16 %v185, %v185
  %190 = vmatprep.subr.bf16.mxu0 0
  %191 = vmatpush1.bf16.msra.mxu0 %v135
  %192 = vmatprep.subr.bf16.mxu0 0
  %193 = vmatpush1.bf16.msra.mxu0 %v134
  %194 = vmatprep.subr.bf16.mxu0 0
  %195 = vmatpush1.bf16.msra.mxu0 %v133
  %196 = vmatprep.subr.bf16.mxu0 0
  %197 = vmatpush1.bf16.msra.mxu0 %v132
  %198 = vmatprep.subr.bf16.mxu0 0
  %199 = vmatpush1.bf16.msra.mxu0 %v131
  %200 = vmatprep.subr.bf16.mxu0 0
  %201 = vmatpush1.bf16.msra.mxu0 %v130
  %202 = vmatprep.subr.bf16.mxu0 0
  %203 = vmatpush1.bf16.msra.mxu0 %v129
  %204 = vmatprep.subr.bf16.mxu0 0
  %205 = vmatpush1.bf16.msra.mxu0 %v128
  %206 = vmatprep.subr.bf16.mxu0 0
  %207 = vmatpush2.bf16.msra.mxu0 0
  %208 = vmatprep.subr.bf16.mxu0 0
  %209 = vmatpush2.bf16.msra.mxu0 0
  %210 = vmatprep.subr.bf16.mxu0 0
  %211 = vmatpush2.bf16.msra.mxu0 0
  %212 = vmatprep.subr.bf16.mxu0 0
  %213 = vmatpush2.bf16.msra.mxu0 0
  %214 = vmatprep.subr.bf16.mxu0 0
  %215 = vmatpush2.bf16.msra.mxu0 0
  %216 = vmatprep.subr.bf16.mxu0 0
  %217 = vmatpush2.bf16.msra.mxu0 0
  %218 = vmatprep.subr.bf16.mxu0 0
  %219 = vmatpush2.bf16.msra.mxu0 0
  %220 = vmatprep.subr.bf16.mxu0 0
  %221 = vmatpush2.bf16.msra.mxu0 0
  %222 = vmatprep.mubr.bf16.mxu0 0
  %223 = vmatmul.mubr.bf16.gmra.mxu0 %v189
  %v224 = vpop.f32.mrf.mxu0
  %v225 = vadd.f32 0.0, %v224
  %v226 = vpop.f32.mrf.mxu0
  %v227 = vpop.f32.mrf.mxu0
  %v228 = vpop.f32.mrf.mxu0
  %229 = vdwg.mxu0
  %v230 = vadd.f32 %v188, %v225
  %v231 = vtanh.pop %v230
  %s232 = scalar_lea.vmem %s0, 8
  %v233 = vld [vmem:[%s232] sm:$0xf]
  %v234 = vunpack.c.l.bf16 %v233
  %v235 = vpack.c.bf16 %v231, %v231
  %236 = vmatprep.subr.bf16.mxu0 0
  %237 = vmatpush1.bf16.msra.mxu0 %v135
  %238 = vmatprep.subr.bf16.mxu0 0
  %239 = vmatpush1.bf16.msra.mxu0 %v134
  %240 = vmatprep.subr.bf16.mxu0 0
  %241 = vmatpush1.bf16.msra.mxu0 %v133
  %242 = vmatprep.subr.bf16.mxu0 0
  %243 = vmatpush1.bf16.msra.mxu0 %v132
  %244 = vmatprep.subr.bf16.mxu0 0
  %245 = vmatpush1.bf16.msra.mxu0 %v131
  %246 = vmatprep.subr.bf16.mxu0 0
  %247 = vmatpush1.bf16.msra.mxu0 %v130
  %248 = vmatprep.subr.bf16.mxu0 0
  %249 = vmatpush1.bf16.msra.mxu0 %v129
  %250 = vmatprep.subr.bf16.mxu0 0
  %251 = vmatpush1.bf16.msra.mxu0 %v128
  %252 = vmatprep.subr.bf16.mxu0 0
  %253 = vmatpush2.bf16.msra.mxu0 0
  %254 = vmatprep.subr.bf16.mxu0 0
  %255 = vmatpush2.bf16.msra.mxu0 0
  %256 = vmatprep.subr.bf16.mxu0 0
  %257 = vmatpush2.bf16.msra.mxu0 0
  %258 = vmatprep.subr.bf16.mxu0 0
  %259 = vmatpush2.bf16.msra.mxu0 0
  %260 = vmatprep.subr.bf16.mxu0 0
  %261 = vmatpush2.bf16.msra.mxu0 0
  %262 = vmatprep.subr.bf16.mxu0 0
  %263 = vmatpush2.bf16.msra.mxu0 0
  %264 = vmatprep.subr.bf16.mxu0 0
  %265 = vmatpush2.bf16.msra.mxu0 0
  %266 = vmatprep.subr.bf16.mxu0 0
  %267 = vmatpush2.bf16.msra.mxu0 0
  %268 = vmatprep.mubr.bf16.mxu0 0
  %269 = vmatmul.mubr.bf16.gmra.mxu0 %v235
  %v270 = vpop.f32.mrf.mxu0
  %v271 = vadd.f32 0.0, %v270
  %v272 = vpop.f32.mrf.mxu0
  %v273 = vpop.f32.mrf.mxu0
  %v274 = vpop.f32.mrf.mxu0
  %275 = vdwg.mxu0
  %v276 = vadd.f32 %v234, %v271
  %v277 = vtanh.pop %v276
  %s278 = scalar_lea.vmem %s0, 12
  %v279 = vld [vmem:[%s278] sm:$0xf]
  %v280 = vunpack.c.l.bf16 %v279
  %v281 = vpack.c.bf16 %v277, %v277
  %282 = vmatprep.subr.bf16.mxu0 0
  %283 = vmatpush1.bf16.msra.mxu0 %v135
  %284 = vmatprep.subr.bf16.mxu0 0
  %285 = vmatpush1.bf16.msra.mxu0 %v134
  %286 = vmatprep.subr.bf16.mxu0 0
  %287 = vmatpush1.bf16.msra.mxu0 %v133
  %288 = vmatprep.subr.bf16.mxu0 0
  %289 = vmatpush1.bf16.msra.mxu0 %v132
  %290 = vmatprep.subr.bf16.mxu0 0
  %291 = vmatpush1.bf16.msra.mxu0 %v131
  %292 = vmatprep.subr.bf16.mxu0 0
  %293 = vmatpush1.bf16.msra.mxu0 %v130
  %294 = vmatprep.subr.bf16.mxu0 0
  %295 = vmatpush1.bf16.msra.mxu0 %v129
  %296 = vmatprep.subr.bf16.mxu0 0
  %297 = vmatpush1.bf16.msra.mxu0 %v128
  %298 = vmatprep.subr.bf16.mxu0 0
  %299 = vmatpush2.bf16.msra.mxu0 0
  %300 = vmatprep.subr.bf16.mxu0 0
  %301 = vmatpush2.bf16.msra.mxu0 0
  %302 = vmatprep.subr.bf16.mxu0 0
  %303 = vmatpush2.bf16.msra.mxu0 0
  %304 = vmatprep.subr.bf16.mxu0 0
  %305 = vmatpush2.bf16.msra.mxu0 0
  %306 = vmatprep.subr.bf16.mxu0 0
  %307 = vmatpush2.bf16.msra.mxu0 0
  %308 = vmatprep.subr.bf16.mxu0 0
  %309 = vmatpush2.bf16.msra.mxu0 0
  %310 = vmatprep.subr.bf16.mxu0 0
  %311 = vmatpush2.bf16.msra.mxu0 0
  %312 = vmatprep.subr.bf16.mxu0 0
  %313 = vmatpush2.bf16.msra.mxu0 0
  %314 = vmatprep.mubr.bf16.mxu0 0
  %315 = vmatmul.mubr.bf16.gmra.mxu0 %v281
  %v316 = vpop.f32.mrf.mxu0
  %v317 = vadd.f32 0.0, %v316
  %v318 = vpop.f32.mrf.mxu0
  %v319 = vpop.f32.mrf.mxu0
  %v320 = vpop.f32.mrf.mxu0
  %321 = vdwg.mxu0
  %v322 = vadd.f32 %v280, %v317
  %v323 = vtanh.pop %v322
  %s324 = scalar_lea.vmem %s0, 16
  %v325 = vld [vmem:[%s324] sm:$0xf]
  %v326 = vunpack.c.l.bf16 %v325
  %v327 = vpack.c.bf16 %v323, %v323
  %328 = vmatprep.subr.bf16.mxu0 0
  %329 = vmatpush1.bf16.msra.mxu0 %v135
  %330 = vmatprep.subr.bf16.mxu0 0
  %331 = vmatpush1.bf16.msra.mxu0 %v134
  %332 = vmatprep.subr.bf16.mxu0 0
  %333 = vmatpush1.bf16.msra.mxu0 %v133
  %334 = vmatprep.subr.bf16.mxu0 0
  %335 = vmatpush1.bf16.msra.mxu0 %v132
  %336 = vmatprep.subr.bf16.mxu0 0
  %337 = vmatpush1.bf16.msra.mxu0 %v131
  %338 = vmatprep.subr.bf16.mxu0 0
  %339 = vmatpush1.bf16.msra.mxu0 %v130
  %340 = vmatprep.subr.bf16.mxu0 0
  %341 = vmatpush1.bf16.msra.mxu0 %v129
  %342 = vmatprep.subr.bf16.mxu0 0
  %343 = vmatpush1.bf16.msra.mxu0 %v128
  %344 = vmatprep.subr.bf16.mxu0 0
  %345 = vmatpush2.bf16.msra.mxu0 0
  %346 = vmatprep.subr.bf16.mxu0 0
  %347 = vmatpush2.bf16.msra.mxu0 0
  %348 = vmatprep.subr.bf16.mxu0 0
  %349 = vmatpush2.bf16.msra.mxu0 0
  %350 = vmatprep.subr.bf16.mxu0 0
  %351 = vmatpush2.bf16.msra.mxu0 0
  %352 = vmatprep.subr.bf16.mxu0 0
  %353 = vmatpush2.bf16.msra.mxu0 0
  %354 = vmatprep.subr.bf16.mxu0 0
  %355 = vmatpush2.bf16.msra.mxu0 0
  %356 = vmatprep.subr.bf16.mxu0 0
  %357 = vmatpush2.bf16.msra.mxu0 0
  %358 = vmatprep.subr.bf16.mxu0 0
  %359 = vmatpush2.bf16.msra.mxu0 0
  %360 = vmatprep.mubr.bf16.mxu0 0
  %361 = vmatmul.mubr.bf16.gmra.mxu0 %v327
  %v362 = vpop.f32.mrf.mxu0
  %v363 = vadd.f32 0.0, %v362
  %v364 = vpop.f32.mrf.mxu0
  %v365 = vpop.f32.mrf.mxu0
  %v366 = vpop.f32.mrf.mxu0
  %367 = vdwg.mxu0
  %v368 = vadd.f32 %v326, %v363
  %v369 = vtanh.pop %v368
  %s370 = scalar_lea.vmem %s0, 20
  %v371 = vld [vmem:[%s370] sm:$0xf]
  %v372 = vunpack.c.l.bf16 %v371
  %v373 = vpack.c.bf16 %v369, %v369
  %374 = vmatprep.subr.bf16.mxu0 0
  %375 = vmatpush1.bf16.msra.mxu0 %v135
  %376 = vmatprep.subr.bf16.mxu0 0
  %377 = vmatpush1.bf16.msra.mxu0 %v134
  %378 = vmatprep.subr.bf16.mxu0 0
  %379 = vmatpush1.bf16.msra.mxu0 %v133
  %380 = vmatprep.subr.bf16.mxu0 0
  %381 = vmatpush1.bf16.msra.mxu0 %v132
  %382 = vmatprep.subr.bf16.mxu0 0
  %383 = vmatpush1.bf16.msra.mxu0 %v131
  %384 = vmatprep.subr.bf16.mxu0 0
  %385 = vmatpush1.bf16.msra.mxu0 %v130
  %386 = vmatprep.subr.bf16.mxu0 0
  %387 = vmatpush1.bf16.msra.mxu0 %v129
  %388 = vmatprep.subr.bf16.mxu0 0
  %389 = vmatpush1.bf16.msra.mxu0 %v128
  %390 = vmatprep.subr.bf16.mxu0 0
  %391 = vmatpush2.bf16.msra.mxu0 0
  %392 = vmatprep.subr.bf16.mxu0 0
  %393 = vmatpush2.bf16.msra.mxu0 0
  %394 = vmatprep.subr.bf16.mxu0 0
  %395 = vmatpush2.bf16.msra.mxu0 0
  %396 = vmatprep.subr.bf16.mxu0 0
  %397 = vmatpush2.bf16.msra.mxu0 0
  %398 = vmatprep.subr.bf16.mxu0 0
  %399 = vmatpush2.bf16.msra.mxu0 0
  %400 = vmatprep.subr.bf16.mxu0 0
  %401 = vmatpush2.bf16.msra.mxu0 0
  %402 = vmatprep.subr.bf16.mxu0 0
  %403 = vmatpush2.bf16.msra.mxu0 0
  %404 = vmatprep.subr.bf16.mxu0 0
  %405 = vmatpush2.bf16.msra.mxu0 0
  %406 = vmatprep.mubr.bf16.mxu0 0
  %407 = vmatmul.mubr.bf16.gmra.mxu0 %v373
  %v408 = vpop.f32.mrf.mxu0
  %v409 = vadd.f32 0.0, %v408
  %v410 = vpop.f32.mrf.mxu0
  %v411 = vpop.f32.mrf.mxu0
  %v412 = vpop.f32.mrf.mxu0
  %413 = vdwg.mxu0
  %v414 = vadd.f32 %v372, %v409
  %v415 = vtanh.pop %v414
  %s416 = scalar_lea.vmem %s0, 24
  %v417 = vld [vmem:[%s416] sm:$0xf]
  %v418 = vunpack.c.l.bf16 %v417
  %v419 = vpack.c.bf16 %v415, %v415
  %420 = vmatprep.subr.bf16.mxu0 0
  %421 = vmatpush1.bf16.msra.mxu0 %v135
  %422 = vmatprep.subr.bf16.mxu0 0
  %423 = vmatpush1.bf16.msra.mxu0 %v134
  %424 = vmatprep.subr.bf16.mxu0 0
  %425 = vmatpush1.bf16.msra.mxu0 %v133
  %426 = vmatprep.subr.bf16.mxu0 0
  %427 = vmatpush1.bf16.msra.mxu0 %v132
  %428 = vmatprep.subr.bf16.mxu0 0
  %429 = vmatpush1.bf16.msra.mxu0 %v131
  %430 = vmatprep.subr.bf16.mxu0 0
  %431 = vmatpush1.bf16.msra.mxu0 %v130
  %432 = vmatprep.subr.bf16.mxu0 0
  %433 = vmatpush1.bf16.msra.mxu0 %v129
  %434 = vmatprep.subr.bf16.mxu0 0
  %435 = vmatpush1.bf16.msra.mxu0 %v128
  %436 = vmatprep.subr.bf16.mxu0 0
  %437 = vmatpush2.bf16.msra.mxu0 0
  %438 = vmatprep.subr.bf16.mxu0 0
  %439 = vmatpush2.bf16.msra.mxu0 0
  %440 = vmatprep.subr.bf16.mxu0 0
  %441 = vmatpush2.bf16.msra.mxu0 0
  %442 = vmatprep.subr.bf16.mxu0 0
  %443 = vmatpush2.bf16.msra.mxu0 0
  %444 = vmatprep.subr.bf16.mxu0 0
  %445 = vmatpush2.bf16.msra.mxu0 0
  %446 = vmatprep.subr.bf16.mxu0 0
  %447 = vmatpush2.bf16.msra.mxu0 0
  %448 = vmatprep.subr.bf16.mxu0 0
  %449 = vmatpush2.bf16.msra.mxu0 0
  %450 = vmatprep.subr.bf16.mxu0 0
  %451 = vmatpush2.bf16.msra.mxu0 0
  %452 = vmatprep.mubr.bf16.mxu0 0
  %453 = vmatmul.mubr.bf16.gmra.mxu0 %v419
  %v454 = vpop.f32.mrf.mxu0
  %v455 = vadd.f32 0.0, %v454
  %v456 = vpop.f32.mrf.mxu0
  %v457 = vpop.f32.mrf.mxu0
  %v458 = vpop.f32.mrf.mxu0
  %459 = vdwg.mxu0
  %v460 = vadd.f32 %v418, %v455
  %v461 = vtanh.pop %v460
  %s462 = scalar_lea.vmem %s0, 28
  %v463 = vld [vmem:[%s462] sm:$0xf]
  %v464 = vunpack.c.l.bf16 %v463
  %v465 = vpack.c.bf16 %v461, %v461
  %466 = vmatprep.subr.bf16.mxu0 0
  %467 = vmatpush1.bf16.msra.mxu0 %v135
  %468 = vmatprep.subr.bf16.mxu0 0
  %469 = vmatpush1.bf16.msra.mxu0 %v134
  %470 = vmatprep.subr.bf16.mxu0 0
  %471 = vmatpush1.bf16.msra.mxu0 %v133
  %472 = vmatprep.subr.bf16.mxu0 0
  %473 = vmatpush1.bf16.msra.mxu0 %v132
  %474 = vmatprep.subr.bf16.mxu0 0
  %475 = vmatpush1.bf16.msra.mxu0 %v131
  %476 = vmatprep.subr.bf16.mxu0 0
  %477 = vmatpush1.bf16.msra.mxu0 %v130
  %478 = vmatprep.subr.bf16.mxu0 0
  %479 = vmatpush1.bf16.msra.mxu0 %v129
  %480 = vmatprep.subr.bf16.mxu0 0
  %481 = vmatpush1.bf16.msra.mxu0 %v128
  %482 = vmatprep.subr.bf16.mxu0 0
  %483 = vmatpush2.bf16.msra.mxu0 0
  %484 = vmatprep.subr.bf16.mxu0 0
  %485 = vmatpush2.bf16.msra.mxu0 0
  %486 = vmatprep.subr.bf16.mxu0 0
  %487 = vmatpush2.bf16.msra.mxu0 0
  %488 = vmatprep.subr.bf16.mxu0 0
  %489 = vmatpush2.bf16.msra.mxu0 0
  %490 = vmatprep.subr.bf16.mxu0 0
  %491 = vmatpush2.bf16.msra.mxu0 0
  %492 = vmatprep.subr.bf16.mxu0 0
  %493 = vmatpush2.bf16.msra.mxu0 0
  %494 = vmatprep.subr.bf16.mxu0 0
  %495 = vmatpush2.bf16.msra.mxu0 0
  %496 = vmatprep.subr.bf16.mxu0 0
  %497 = vmatpush2.bf16.msra.mxu0 0
  %498 = vmatprep.mubr.bf16.mxu0 0
  %499 = vmatmul.mubr.bf16.gmra.mxu0 %v465
  %v500 = vpop.f32.mrf.mxu0
  %v501 = vadd.f32 0.0, %v500
  %v502 = vpop.f32.mrf.mxu0
  %v503 = vpop.f32.mrf.mxu0
  %v504 = vpop.f32.mrf.mxu0
  %505 = vdwg.mxu0
  %v506 = vadd.f32 %v464, %v501
  %v507 = vtanh.pop %v506
  %508 = vst [vmem:[%s2] sm:$0xff] %v507
  // Predicated region
  $region44: #{encoder_forward.1} parent=0 // pred_check
    _
  $region45: #{encoder_forward.1} parent=0 // pred_check_branch
    %510 = sbr.rel (0) target = $region47
  $region46: #{encoder_forward.1} parent=0 // pred_region
    _
  $region47: #{encoder_forward.1} parent=0 // pred_fallthru
    _
  // Predicated region
  $region48: #{encoder_forward.1} parent=0 // pred_check
    _
  $region49: #{encoder_forward.1} parent=0 // pred_check_branch
    %512 = sbr.rel (0) target = $region51
  $region50: #{encoder_forward.1} parent=0 // pred_region
    _
  $region51: #{encoder_forward.1} parent=0 // pred_fallthru
    _
  %513 = vsyncmov [#allocation3]
  %s514 = vpop.sfrf %513
  %p515 = scmp.eq.s32.totalorder %s514, 0
  %p516 = pneg %p515
  %518 = shalt.err (%p516)

</llo_original>
